<compile_context>
chip_gen: v6e
topology: v6e:2x2x1
jax: 0.10.0
libtpu: 0.0.40
codegen_flags: <defaults>
</compile_context>

<pallas_src>
import functools

import jax
import jax.numpy as jnp
from jax import lax
from jax.experimental import pallas as pl
from jax.experimental.pallas import tpu as pltpu


def _round_up(x, m):
    return -(-x // m) * m


_MIN_MEGACORE_SPLIT = 256  # split the batch across >=2 grid steps only if each part >= this


def _pick_batch_tile(batch, tile_m):
    """Batch tiling for a cdiv grid (no padding, no wrapper-side copies)."""
    n_steps = pl.cdiv(batch, tile_m)
    if n_steps < 2 and batch >= 2 * _MIN_MEGACORE_SPLIT:
        n_steps = 2  # give the "parallel" axis >=2 steps so v7x megacore can split it
    if n_steps == 1:
        tm = batch                               # block == full batch dim (always legal)
    else:
        tm = _round_up(pl.cdiv(batch, n_steps), 8)  # 8-row sublane alignment
    return tm, pl.cdiv(batch, tm)


def _vmem_limit_bytes(tm, din, dout, itemsize):
    resident = (din * dout + dout) * itemsize        # weight + bias (single-buffered)
    streamed = 2 * tm * (din + dout) * itemsize      # x / y tiles (double-buffered)
    budget = resident + streamed
    return int(min(64 * 1024 * 1024, max(2 * budget, 4 * 1024 * 1024)))


def _resident_spec(block_shape, *, single_buffer):
    """Weight/bias/scale blocks: index (0, 0) every step -> resident in VMEM."""
    if single_buffer:
        # Only one VMEM copy is needed since the block never changes.
        return pl.BlockSpec(block_shape, lambda i: (0, 0),
                            pipeline_mode=pl.Buffered(1))
    return pl.BlockSpec(block_shape, lambda i: (0, 0))


def _apply_act(y, act_fn):
    if act_fn is None:
        return y
    if act_fn == "relu":
        return jnp.maximum(y, 0.0)
    if act_fn == "relu6":
        return jnp.clip(y, 0.0, 6.0)
    if act_fn == "leaky_relu":
        return jnp.where(y >= 0.0, y, 0.01 * y)   # PyTorch default negative_slope
    if act_fn == "tanh":
        return jnp.tanh(y)
    raise ValueError(f"unsupported act_fn: {act_fn}")


# ---------------------------------------------------------------------------
# Kernels
# ---------------------------------------------------------------------------
def _linear_act_kernel(x_ref, w_ref, b_ref, o_ref, *, act_fn):
    # x: (tm, Din)  w: (Din, Dout)  b: (1, Dout)  o: (tm, Dout)
    y = jnp.dot(x_ref[...], w_ref[...], preferred_element_type=jnp.float32)
    y = y + b_ref[...].astype(jnp.float32)
    y = _apply_act(y, act_fn)
    o_ref[...] = y.astype(o_ref.dtype)


def _linear_act_stats_kernel(x_ref, w_ref, b_ref, o_ref, stats_ref, *,
                             act_fn, tile_m, batch):
    """Linear(+act) plus streaming per-column batch statistics.

    stats_ref (resident output accumulator, f32, shape (2, Dout)):
      row 0 = running mean, row 1 = running M2 = sum((y - mean)^2),
      combined tile-by-tile with Chan's parallel-variance formula.
    """
    i = pl.program_id(0)
    y = jnp.dot(x_ref[...], w_ref[...], preferred_element_type=jnp.float32)
    y = y + b_ref[...].astype(jnp.float32)
    y = _apply_act(y, act_fn)
    o_ref[...] = y.astype(o_ref.dtype)

    # Masked per-tile statistics: the last tile may be ragged and its garbage
    # rows must not contribute to the batch statistics.
    row = i * tile_m + lax.broadcasted_iota(jnp.int32, y.shape, 0)
    valid = row < batch
    n_prev = jnp.minimum(i * tile_m, batch).astype(jnp.float32)
    n_tile = jnp.minimum((i + 1) * tile_m, batch).astype(jnp.float32) - n_prev
    y_valid = jnp.where(valid, y, 0.0)
    t_mean = jnp.sum(y_valid, axis=0, keepdims=True) / n_tile
    d = jnp.where(valid, y - t_mean, 0.0)
    t_m2 = jnp.sum(d * d, axis=0, keepdims=True)

    @pl.when(i == 0)
    def _():
        stats_ref[...] = jnp.zeros_like(stats_ref)

    mean = stats_ref[0:1, :]
    m2 = stats_ref[1:2, :]
    n_new = n_prev + n_tile
    delta = t_mean - mean
    stats_ref[0:1, :] = mean + delta * (n_tile / n_new)
    stats_ref[1:2, :] = m2 + t_m2 + delta * delta * (n_prev * n_tile / n_new)


def _bn_apply_kernel(y_ref, mean_ref, scale_ref, o_ref):
    y = y_ref[...].astype(jnp.float32)
    o_ref[...] = ((y - mean_ref[...]) * scale_ref[...]).astype(o_ref.dtype)


# ---------------------------------------------------------------------------
# Wrapper
# ---------------------------------------------------------------------------
def readout_forward(feature, weight_t, bias, *, act_fn="relu", use_bn=False,
                    eps=1e-5, tile_m=1024):
    """ReadOut forward.

    feature:  (B, input_dim)               f32 or bf16
    weight_t: (input_dim, output_dim)      Linear weight stored pre-transposed
    bias:     (output_dim,) or (1, output_dim)
    """
    assert act_fn in (None, "relu", "relu6", "leaky_relu", "tanh")
    batch, din = feature.shape
    din_w, dout = weight_t.shape
    assert din == din_w
    bias2d = bias.reshape(1, dout)                       # free layout change, no copy
    itemsize = jnp.dtype(feature.dtype).itemsize

    tm, grid_m = _pick_batch_tile(batch, tile_m)
    vmem_limit = _vmem_limit_bytes(tm, din, dout, itemsize)

    cost = pl.CostEstimate(
        flops=2 * batch * din * dout,
        transcendentals=0,
        bytes_accessed=itemsize * (batch * din + din * dout + dout + batch * dout),
    )

    def _impl(single_buffer):
        x_spec = pl.BlockSpec((tm, din), lambda i: (i, 0))
        y_spec = pl.BlockSpec((tm, dout), lambda i: (i, 0))
        w_spec = _resident_spec((din, dout), single_buffer=single_buffer)
        b_spec = _resident_spec((1, dout), single_buffer=single_buffer)

        if not use_bn:
            kernel = functools.partial(_linear_act_kernel, act_fn=act_fn)
            return pl.pallas_call(
                kernel,
                out_shape=jax.ShapeDtypeStruct((batch, dout), feature.dtype),
                grid_spec=pl.GridSpec(
                    grid=(grid_m,),
                    in_specs=[x_spec, w_spec, b_spec],
                    out_specs=y_spec),
                compiler_params=pltpu.CompilerParams(
                    dimension_semantics=("parallel",),
                    vmem_limit_bytes=vmem_limit),
                cost_estimate=cost,
            )(feature, weight_t, bias2d)

        # ---- use_bn=True: pass 1 = linear(+act) + streamed batch statistics ----
        kernel1 = functools.partial(_linear_act_stats_kernel, act_fn=act_fn,
                                    tile_m=tm, batch=batch)
        y, stats = pl.pallas_call(
            kernel1,
            out_shape=(jax.ShapeDtypeStruct((batch, dout), feature.dtype),
                       jax.ShapeDtypeStruct((2, dout), jnp.float32)),
            grid_spec=pl.GridSpec(
                grid=(grid_m,),
                in_specs=[x_spec, w_spec, b_spec],
                out_specs=(y_spec, pl.BlockSpec((2, dout), lambda i: (0, 0)))),
            compiler_params=pltpu.CompilerParams(
                dimension_semantics=("arbitrary",),   # stats block is revisited
                vmem_limit_bytes=vmem_limit),
            cost_estimate=cost,
        )(feature, weight_t, bias2d)

        mean = stats[0:1, :]
        var = stats[1:2, :] * (1.0 / batch)              # biased variance (BN train mode)
        scale = lax.rsqrt(var + jnp.float32(eps))        # gamma=1, beta=0 (init defaults)

        # ---- pass 2: normalize the y tiles (streamed, parallel across TCs) ----
        m_spec = _resident_spec((1, dout), single_buffer=single_buffer)
        s_spec = _resident_spec((1, dout), single_buffer=single_buffer)
        return pl.pallas_call(
            _bn_apply_kernel,
            out_shape=jax.ShapeDtypeStruct((batch, dout), feature.dtype),
            grid_spec=pl.GridSpec(
                grid=(grid_m,),
                in_specs=[y_spec, m_spec, s_spec],
                out_specs=y_spec),
            compiler_params=pltpu.CompilerParams(
                dimension_semantics=("parallel",),
                vmem_limit_bytes=vmem_limit),
        )(y, mean, scale)

    try:
        return _impl(single_buffer=True)
    except Exception:
        # Fallback for jax versions where pipeline_mode=pl.Buffered(1) is not
        # supported on pallas_call BlockSpecs: use default double-buffering.
        return _impl(single_buffer=False)


def init_readout_params(key, input_dim, output_dim):
    """Mirror the PyTorch module init:
       - weight: xavier_uniform_, shape (output_dim, input_dim) -> stored transposed
       - bias:   nn.Linear default U(-1/sqrt(fan_in), 1/sqrt(fan_in))
    The transpose is done once here so the forward path has no per-call copies.
    """
    k_w, k_b = jax.random.split(key)
    limit_w = jnp.sqrt(6.0 / (input_dim + output_dim))
    weight = jax.random.uniform(k_w, (output_dim, input_dim),
                                minval=-limit_w, maxval=limit_w, dtype=jnp.float32)
    limit_b = 1.0 / jnp.sqrt(jnp.float32(input_dim))
    bias = jax.random.uniform(k_b, (output_dim,),
                              minval=-limit_b, maxval=limit_b, dtype=jnp.float32)
    return weight.T, bias  # (input_dim, output_dim), (output_dim,)


def _reference(feature, weight_t, bias, *, act_fn="relu", use_bn=False, eps=1e-5):
    y = feature @ weight_t + bias.reshape(1, -1)
    if act_fn == "relu":
        y = jnp.maximum(y, 0.0)
    elif act_fn == "tanh":
        y = jnp.tanh(y)
    if use_bn:
        mean = jnp.mean(y, axis=0, keepdims=True)
        var = jnp.mean((y - mean) ** 2, axis=0, keepdims=True)  # biased variance
        y = (y - mean) * lax.rsqrt(var + eps)
    return y


if __name__ == "__main__":
    key = jax.random.PRNGKey(0)
    k_x, k_x2, k_p = jax.random.split(key, 3)

    input_dim, output_dim = 32, 16
    weight_t, bias = init_readout_params(k_p, input_dim, output_dim)

    # Case 1: relu, no BN, small batch (single tile).
    feat16 = jax.random.normal(k_x, (16, input_dim), dtype=jnp.float32)
    out1 = jax.block_until_ready(readout_forward(feat16, weight_t, bias, act_fn="relu"))
    ref1 = _reference(feat16, weight_t, bias, act_fn="relu")
    assert out1.shape == (16, output_dim)
    assert jnp.allclose(out1, ref1, atol=1e-5, rtol=1e-5)

    # Case 2: batch not a multiple of the tile -> cdiv grid with ragged last block.
    feat40 = jax.random.normal(k_x2, (40, input_dim), dtype=jnp.float32)
    out2 = jax.block_until_ready(
        readout_forward(feat40, weight_t, bias, act_fn="relu", tile_m=16))
    ref2 = _reference(feat40, weight_t, bias, act_fn="relu")
    assert out2.shape == (40, output_dim)
    assert jnp.allclose(out2, ref2, atol=1e-5, rtol=1e-5)

    # Case 3: use_bn=True, whole batch in one tile.
    out3 = jax.block_until_ready(
        readout_forward(feat16, weight_t, bias, act_fn="relu", use_bn=True))
    ref3 = _reference(feat16, weight_t, bias, act_fn="relu", use_bn=True)
    assert jnp.allclose(out3, ref3, atol=1e-4, rtol=1e-4)

    # Case 4: use_bn=True streamed over multiple tiles with a ragged last tile
    #         (exercises masked per-tile stats + Chan combining).
    out4 = jax.block_until_ready(
        readout_forward(feat40, weight_t, bias, act_fn="relu", use_bn=True, tile_m=16))
    ref4 = _reference(feat40, weight_t, bias, act_fn="relu", use_bn=True)
    assert jnp.allclose(out4, ref4, atol=1e-4, rtol=1e-4)

    # Case 5: bf16 activations / weights / output (f32 accumulation inside the kernel).
    feat_bf = feat40.astype(jnp.bfloat16)
    w_bf, b_bf = weight_t.astype(jnp.bfloat16), bias.astype(jnp.bfloat16)
    out5 = jax.block_until_ready(
        readout_forward(feat_bf, w_bf, b_bf, act_fn="relu", tile_m=16))
    ref5 = _reference(feat_bf.astype(jnp.float32), w_bf.astype(jnp.float32),
                      b_bf.astype(jnp.float32), act_fn="relu")
    assert out5.dtype == jnp.bfloat16
    assert jnp.allclose(out5.astype(jnp.float32), ref5, atol=2e-2, rtol=2e-2)

    # TODO(synk): BatchNorm1d running-stats (momentum) update, eval mode, and learned
    # gamma/beta are not modeled; the kernel implements training-mode batch statistics
    # with PyTorch init defaults (gamma=1, beta=0).
    print("KERNEL_OK")
</pallas_src>

<mosaic_0001>
module attributes {stable_mosaic.version = 11 : i64} {
  func.func @_linear_act_kernel(%arg0: i32, %arg1: memref<16x32xf32, #tpu.memory_space<vmem>>, %arg2: memref<32x16xf32, #tpu.memory_space<vmem>>, %arg3: memref<1x16xf32, #tpu.memory_space<vmem>>, %arg4: memref<16x16xf32, #tpu.memory_space<vmem>>) attributes {dimension_semantics = [#tpu.dimension_semantics<parallel>], iteration_bounds = array<i64: 1>, scalar_prefetch = 0 : i64, scratch_operands = 0 : i64, tpu.core_type = #tpu.core_type<tc>, window_params = [{transform_indices = @transform_0, window_bounds = array<i64: 16, 32>}, {pipeline_mode = #tpu.pipeline_mode<synchronous>, transform_indices = @transform_1, window_bounds = array<i64: 32, 16>}, {pipeline_mode = #tpu.pipeline_mode<synchronous>, transform_indices = @transform_2, window_bounds = array<i64: 1, 16>}, {transform_indices = @transform_3, window_bounds = array<i64: 16, 16>}]} {
    %c0 = arith.constant 0 : index
    %c0_0 = arith.constant 0 : index
    %0 = vector.load %arg1[%c0, %c0_0] : memref<16x32xf32, #tpu.memory_space<vmem>>, vector<16x32xf32>
    %c0_1 = arith.constant 0 : index
    %c0_2 = arith.constant 0 : index
    %1 = vector.load %arg2[%c0_1, %c0_2] : memref<32x16xf32, #tpu.memory_space<vmem>>, vector<32x16xf32>
    %cst = arith.constant dense<0.000000e+00> : vector<16x16xf32>
    %2 = tpu.matmul %0, %1, %cst {dimension_numbers = #tpu.dot_dimension_numbers<[1], [0], [0], [1], [0, 0, 1, 1], [], []>} : vector<16x32xf32>, vector<32x16xf32>, vector<16x16xf32> -> vector<16x16xf32>
    %c0_3 = arith.constant 0 : index
    %c0_4 = arith.constant 0 : index
    %3 = vector.load %arg3[%c0_3, %c0_4] : memref<1x16xf32, #tpu.memory_space<vmem>>, vector<1x16xf32>
    %4 = vector.broadcast %3 : vector<1x16xf32> to vector<16x16xf32>
    %5 = arith.addf %2, %4 : vector<16x16xf32>
    %cst_5 = arith.constant 0.000000e+00 : f32
    %6 = vector.broadcast %cst_5 : f32 to vector<16x16xf32>
    %7 = arith.maximumf %5, %6 : vector<16x16xf32>
    %c0_6 = arith.constant 0 : index
    %c0_7 = arith.constant 0 : index
    %8 = vector.load %arg4[%c0_6, %c0_7] : memref<16x16xf32, #tpu.memory_space<vmem>>, vector<16x16xf32>
    tpu.vector_store %arg4[%c0_6, %c0_7], %7 {strides = array<i32>} : memref<16x16xf32, #tpu.memory_space<vmem>>, vector<16x16xf32>,
    return
  }
  func.func @transform_0(%arg0: i32) -> (i32, i32) {
    %c0_i32 = arith.constant 0 : i32
    %c0_i32_0 = arith.constant 0 : i32
    return %arg0, %c0_i32 : i32, i32
  }
  func.func @transform_1(%arg0: i32) -> (i32, i32) {
    %c0_i32 = arith.constant 0 : i32
    %c0_i32_0 = arith.constant 0 : i32
    %c0_i32_1 = arith.constant 0 : i32
    return %c0_i32, %c0_i32_0 : i32, i32
  }
  func.func @transform_2(%arg0: i32) -> (i32, i32) {
    %c0_i32 = arith.constant 0 : i32
    %c0_i32_0 = arith.constant 0 : i32
    %c0_i32_1 = arith.constant 0 : i32
    return %c0_i32, %c0_i32_0 : i32, i32
  }
  func.func @transform_3(%arg0: i32) -> (i32, i32) {
    %c0_i32 = arith.constant 0 : i32
    %c0_i32_0 = arith.constant 0 : i32
    return %arg0, %c0_i32 : i32, i32
  }
}

module attributes {stable_mosaic.version = 11 : i64} {
  func.func @_linear_act_kernel(%arg0: i32, %arg1: memref<16x32xf32, #tpu.memory_space<vmem>>, %arg2: memref<32x16xf32, #tpu.memory_space<vmem>>, %arg3: memref<1x16xf32, #tpu.memory_space<vmem>>, %arg4: memref<16x16xf32, #tpu.memory_space<vmem>>) attributes {dimension_semantics = [#tpu.dimension_semantics<parallel>], iteration_bounds = array<i64: 1>, scalar_prefetch = 0 : i64, scratch_operands = 0 : i64, tpu.core_type = #tpu.core_type<tc>, window_params = [{transform_indices = @transform_0, window_bounds = array<i64: 16, 32>}, {pipeline_mode = #tpu.pipeline_mode<synchronous>, transform_indices = @transform_1, window_bounds = array<i64: 32, 16>}, {pipeline_mode = #tpu.pipeline_mode<synchronous>, transform_indices = @transform_2, window_bounds = array<i64: 1, 16>}, {transform_indices = @transform_3, window_bounds = array<i64: 16, 16>}]} {
    %c0 = arith.constant 0 : index
    %c0_0 = arith.constant 0 : index
    %0 = vector.load %arg1[%c0, %c0_0] : memref<16x32xf32, #tpu.memory_space<vmem>>, vector<16x32xf32>
    %c0_1 = arith.constant 0 : index
    %c0_2 = arith.constant 0 : index
    %1 = vector.load %arg2[%c0_1, %c0_2] : memref<32x16xf32, #tpu.memory_space<vmem>>, vector<32x16xf32>
    %cst = arith.constant dense<0.000000e+00> : vector<16x16xf32>
    %2 = tpu.matmul %0, %1, %cst {dimension_numbers = #tpu.dot_dimension_numbers<[1], [0], [0], [1], [0, 0, 1, 1], [], []>} : vector<16x32xf32>, vector<32x16xf32>, vector<16x16xf32> -> vector<16x16xf32>
    %c0_3 = arith.constant 0 : index
    %c0_4 = arith.constant 0 : index
    %3 = vector.load %arg3[%c0_3, %c0_4] : memref<1x16xf32, #tpu.memory_space<vmem>>, vector<1x16xf32>
    %4 = vector.broadcast %3 : vector<1x16xf32> to vector<16x16xf32>
    %5 = arith.addf %2, %4 : vector<16x16xf32>
    %cst_5 = arith.constant 0.000000e+00 : f32
    %6 = vector.broadcast %cst_5 : f32 to vector<16x16xf32>
    %7 = arith.maximumf %5, %6 : vector<16x16xf32>
    %c0_6 = arith.constant 0 : index
    %c0_7 = arith.constant 0 : index
    %8 = vector.load %arg4[%c0_6, %c0_7] : memref<16x16xf32, #tpu.memory_space<vmem>>, vector<16x16xf32>
    tpu.vector_store %arg4[%c0_6, %c0_7], %7 {strides = array<i32>} : memref<16x16xf32, #tpu.memory_space<vmem>>, vector<16x16xf32>,
    return
  }
  func.func @transform_0(%arg0: i32) -> (i32, i32) {
    %c0_i32 = arith.constant 0 : i32
    %c0_i32_0 = arith.constant 0 : i32
    return %arg0, %c0_i32 : i32, i32
  }
  func.func @transform_1(%arg0: i32) -> (i32, i32) {
    %c0_i32 = arith.constant 0 : i32
    %c0_i32_0 = arith.constant 0 : i32
    %c0_i32_1 = arith.constant 0 : i32
    return %c0_i32, %c0_i32_0 : i32, i32
  }
  func.func @transform_2(%arg0: i32) -> (i32, i32) {
    %c0_i32 = arith.constant 0 : i32
    %c0_i32_0 = arith.constant 0 : i32
    %c0_i32_1 = arith.constant 0 : i32
    return %c0_i32, %c0_i32_0 : i32, i32
  }
  func.func @transform_3(%arg0: i32) -> (i32, i32) {
    %c0_i32 = arith.constant 0 : i32
    %c0_i32_0 = arith.constant 0 : i32
    return %arg0, %c0_i32 : i32, i32
  }
}

</mosaic_0001>

<llo_original>
// kernel: tpu_custom_call.1
$region0: #{tpu_custom_call.1}
  #allocation0 [shape = 'u32[]', space=smem, size = 0x4, offset = 0x4, fixed_abs, tag = 'smem constant byte address 0x4 - core index']
  #allocation1 [shape = 'u32[144,128]{1,0:T(1,128)}', space=vmem, size = 0x12000, scoped, tag = 'internal scratch']
  %s0 = inlined_call_operand.vmem [shape: f32[16,32], index: 0, kind: input, shape index: {}]
  %s1 = inlined_call_operand.vmem [shape: f32[32,16], index: 1, kind: input, shape index: {}]
  %s2 = inlined_call_operand.vmem [shape: f32[1,16], index: 2, kind: input, shape index: {}]
  %s3 = inlined_call_operand.hbm [shape: f32[16,16], index: 3, kind: output, shape index: {}]
  %s4 = sld [smem:[#allocation0]]
  $region22: #{tpu_custom_call.1} parent=0
    _
  %s6 = ssub.s32 1, %s4
  %s7 = scalar_select 0, %s6, %s4
  $region1: #{tpu_custom_call.1} parent=0
    #allocation2 [shape = 'u8[8192]{0}', space=vmem, size = 0x2000, scoped, tag = 'output window, operand 0, single buffered']
    #allocation3 [shape = 's32[1]{0}', space=sflag, size = 0x4, scoped, tag = 'scoped memory for tpu_custom_call.1']
    %8 = vsyncpa [#allocation3], 0
    // Predicated region
    $region2: #{tpu_custom_call.1} parent=1 // pred_check
      _
    $region3: #{tpu_custom_call.1} parent=1 // pred_check_branch
      %10 = sbr.rel (0) target = $region5
    $region4: #{tpu_custom_call.1} parent=1 // pred_region
      _
    $region5: #{tpu_custom_call.1} parent=1 // pred_fallthru
      _
    // Predicated region
    $region6: #{tpu_custom_call.1} parent=1 // pred_check
      _
    $region7: #{tpu_custom_call.1} parent=1 // pred_check_branch
      %12 = sbr.rel (0) target = $region9
    $region8: #{tpu_custom_call.1} parent=1 // pred_region
      _
    $region9: #{tpu_custom_call.1} parent=1 // pred_fallthru
      _
    // Predicated region
    $region10: #{tpu_custom_call.1} parent=1 // pred_check
      _
    $region11: #{tpu_custom_call.1} parent=1 // pred_check_branch
      %14 = sbr.rel (0) target = $region13
    $region12: #{tpu_custom_call.1} parent=1 // pred_region
      _
    $region13: #{tpu_custom_call.1} parent=1 // pred_fallthru
      _
    %v15 = vld [vmem:[%s0] sm:$0xff]
    %v16 = vld [vmem:[%s0 + $0x8] sm:$0xff]
    %v17 = vld [vmem:[%s1] sm:$0xff]
    %v18 = vld [vmem:[%s1 + $0x8] sm:$0xff]
    %v19 = vld [vmem:[%s1 + $0x10] sm:$0xff]
    %v20 = vld [vmem:[%s1 + $0x18] sm:$0xff]
    %v21 = vld [vmem:[%s2] sm:$0x1]
    %v23 = vlaneseq
    %v24 = vshrl.u32 %v23, 7
    %v25 = vsub.s32 0, %v24
    %v26 = vrot.slane %v21, %v25
    %vm28 = vcmask 261120
    %v30 = vsel %vm28, %v15, 0
    %v33 = vsel %vm28, %v16, 0
    %35 = vmatprep.subr.mxu0 0.0
    %36 = vmatpush1.msra.mxu0 0.0
    %37 = vmatprep.subr.mxu0 0.0
    %38 = vmatpush1.msra.mxu0 0.0
    %39 = vmatprep.subr.mxu0 0.0
    %40 = vmatpush1.msra.mxu0 0.0
    %41 = vmatprep.subr.mxu0 0.0
    %42 = vmatpush1.msra.mxu0 0.0
    %43 = vmatprep.subr.mxu0 0.0
    %44 = vmatpush1.msra.mxu0 0.0
    %45 = vmatprep.subr.mxu0 0.0
    %46 = vmatpush1.msra.mxu0 0.0
    %47 = vmatprep.subr.mxu0 0.0
    %48 = vmatpush1.msra.mxu0 0.0
    %49 = vmatprep.subr.mxu0 0.0
    %50 = vmatpush1.msra.mxu0 0.0
    %51 = vmatprep.subr.mxu0 0.0
    %52 = vmatpush1.msra.mxu0 0.0
    %53 = vmatprep.subr.mxu0 0.0
    %54 = vmatpush1.msra.mxu0 0.0
    %55 = vmatprep.subr.mxu0 0.0
    %56 = vmatpush1.msra.mxu0 0.0
    %57 = vmatprep.subr.mxu0 0.0
    %58 = vmatpush1.msra.mxu0 0.0
    %59 = vmatprep.subr.mxu0 0.0
    %60 = vmatpush1.msra.mxu0 %v20
    %61 = vmatprep.subr.mxu0 0.0
    %62 = vmatpush1.msra.mxu0 %v19
    %63 = vmatprep.subr.mxu0 0.0
    %64 = vmatpush1.msra.mxu0 %v18
    %65 = vmatprep.subr.mxu0 0.0
    %66 = vmatpush1.msra.mxu0 %v17
    %67 = vmatprep.subr.mxu0 0.0
    %68 = vmatpush2.msra.mxu0 0.0
    %69 = vmatprep.subr.mxu0 0.0
    %70 = vmatpush2.msra.mxu0 0.0
    %71 = vmatprep.subr.mxu0 0.0
    %72 = vmatpush2.msra.mxu0 0.0
    %73 = vmatprep.subr.mxu0 0.0
    %74 = vmatpush2.msra.mxu0 0.0
    %75 = vmatprep.subr.mxu0 0.0
    %76 = vmatpush2.msra.mxu0 0.0
    %77 = vmatprep.subr.mxu0 0.0
    %78 = vmatpush2.msra.mxu0 0.0
    %79 = vmatprep.subr.mxu0 0.0
    %80 = vmatpush2.msra.mxu0 0.0
    %81 = vmatprep.subr.mxu0 0.0
    %82 = vmatpush2.msra.mxu0 0.0
    %83 = vmatprep.subr.mxu0 0.0
    %84 = vmatpush2.msra.mxu0 0.0
    %85 = vmatprep.subr.mxu0 0.0
    %86 = vmatpush2.msra.mxu0 0.0
    %87 = vmatprep.subr.mxu0 0.0
    %88 = vmatpush2.msra.mxu0 0.0
    %89 = vmatprep.subr.mxu0 0.0
    %90 = vmatpush2.msra.mxu0 0.0
    %91 = vmatprep.subr.mxu0 0.0
    %92 = vmatpush2.msra.mxu0 0.0
    %93 = vmatprep.subr.mxu0 0.0
    %94 = vmatpush2.msra.mxu0 0.0
    %95 = vmatprep.subr.mxu0 0.0
    %96 = vmatpush2.msra.mxu0 0.0
    %97 = vmatprep.subr.mxu0 0.0
    %98 = vmatpush2.msra.mxu0 0.0
    %99 = vmatprep.mubr.f32.mxu0 0.0
    %100 = vmatmul.mubr.f32.gmra.mxu0 %v30
    %v101 = vpop.f32.mrf.mxu0
    %v102 = vadd.f32 %v26, %v101
    %v103 = vpop.f32.mrf.mxu0
    %104 = vmatprep.mubr.f32.mxu0 0.0
    %105 = vmatmul.mubr.f32.gmra.mxu0 %v33
    %v106 = vpop.f32.mrf.mxu0
    %v107 = vadd.f32 %v26, %v106
    %v108 = vpop.f32.mrf.mxu0
    %109 = vdwg.mxu0
    %v110 = vmax.f32 %v102, 0.0
    %v111 = vmax.f32 %v107, 0.0
    %vm112 = vcmask 130048
    %113 = vst.msk [vmem:[#allocation2] sm:$0xff] %vm112, %v110
    %114 = vst.msk [vmem:[#allocation2 + $0x8] sm:$0xff] %vm112, %v111
    // Predicated region
    $region14: #{tpu_custom_call.1} parent=1 // pred_check
      _
    $region15: #{tpu_custom_call.1} parent=1 // pred_check_branch
      %116 = sbr.rel (0) target = $region17
    $region16: #{tpu_custom_call.1} parent=1 // pred_region
      %s118 = ssub.s32 256, 256
      %119 = vsyncadd [#allocation3], %s118
      %s120 = sshll.u32 [#allocation2], 4
      %s121 = int_to_ptr.vmem [resolvable:$true] %s120
      %126 = dma.vmem_to_hbm [thread:$0]  %s121, 256, %s3, [#allocation3], 128, 128, 8
    $region17: #{tpu_custom_call.1} parent=1 // pred_fallthru
      _
    // Predicated region
    $region18: #{tpu_custom_call.1} parent=1 // pred_check
      _
    $region19: #{tpu_custom_call.1} parent=1 // pred_check_branch
      %128 = sbr.rel (0) target = $region21
    $region20: #{tpu_custom_call.1} parent=1 // pred_region
      %129 = dma.done [#allocation3], 256
    $region21: #{tpu_custom_call.1} parent=1 // pred_fallthru
      _
    %130 = vsyncpa [#allocation3], 1

// kernel: tpu_custom_call.1
$region0: #{tpu_custom_call.1}
  #allocation0 [shape = 'u32[]', space=smem, size = 0x4, offset = 0x4, fixed_abs, tag = 'smem constant byte address 0x4 - core index']
  #allocation1 [shape = 'u32[144,128]{1,0:T(1,128)}', space=vmem, size = 0x12000, scoped, tag = 'internal scratch']
  %s0 = inlined_call_operand.vmem [shape: f32[16,32], index: 0, kind: input, shape index: {}]
  %s1 = inlined_call_operand.vmem [shape: f32[32,16], index: 1, kind: input, shape index: {}]
  %s2 = inlined_call_operand.vmem [shape: f32[1,16], index: 2, kind: input, shape index: {}]
  %s3 = inlined_call_operand.hbm [shape: f32[16,16], index: 3, kind: output, shape index: {}]
  %s4 = sld [smem:[#allocation0]]
  $region22: #{tpu_custom_call.1} parent=0
    _
  %s6 = ssub.s32 1, %s4
  %s7 = scalar_select 0, %s6, %s4
  $region1: #{tpu_custom_call.1} parent=0
    #allocation2 [shape = 'u8[8192]{0}', space=vmem, size = 0x2000, scoped, tag = 'output window, operand 0, single buffered']
    #allocation3 [shape = 's32[1]{0}', space=sflag, size = 0x4, scoped, tag = 'scoped memory for tpu_custom_call.1']
    %8 = vsyncpa [#allocation3], 0
    // Predicated region
    $region2: #{tpu_custom_call.1} parent=1 // pred_check
      _
    $region3: #{tpu_custom_call.1} parent=1 // pred_check_branch
      %10 = sbr.rel (0) target = $region5
    $region4: #{tpu_custom_call.1} parent=1 // pred_region
      _
    $region5: #{tpu_custom_call.1} parent=1 // pred_fallthru
      _
    // Predicated region
    $region6: #{tpu_custom_call.1} parent=1 // pred_check
      _
    $region7: #{tpu_custom_call.1} parent=1 // pred_check_branch
      %12 = sbr.rel (0) target = $region9
    $region8: #{tpu_custom_call.1} parent=1 // pred_region
      _
    $region9: #{tpu_custom_call.1} parent=1 // pred_fallthru
      _
    // Predicated region
    $region10: #{tpu_custom_call.1} parent=1 // pred_check
      _
    $region11: #{tpu_custom_call.1} parent=1 // pred_check_branch
      %14 = sbr.rel (0) target = $region13
    $region12: #{tpu_custom_call.1} parent=1 // pred_region
      _
    $region13: #{tpu_custom_call.1} parent=1 // pred_fallthru
      _
    %v15 = vld [vmem:[%s0] sm:$0xff]
    %v16 = vld [vmem:[%s0 + $0x8] sm:$0xff]
    %v17 = vld [vmem:[%s1] sm:$0xff]
    %v18 = vld [vmem:[%s1 + $0x8] sm:$0xff]
    %v19 = vld [vmem:[%s1 + $0x10] sm:$0xff]
    %v20 = vld [vmem:[%s1 + $0x18] sm:$0xff]
    %v21 = vld [vmem:[%s2] sm:$0x1]
    %v23 = vlaneseq
    %v24 = vshrl.u32 %v23, 7
    %v25 = vsub.s32 0, %v24
    %v26 = vrot.slane %v21, %v25
    %vm28 = vcmask 261120
    %v30 = vsel %vm28, %v15, 0
    %v33 = vsel %vm28, %v16, 0
    %35 = vmatprep.subr.mxu0 0.0
    %36 = vmatpush1.msra.mxu0 0.0
    %37 = vmatprep.subr.mxu0 0.0
    %38 = vmatpush1.msra.mxu0 0.0
    %39 = vmatprep.subr.mxu0 0.0
    %40 = vmatpush1.msra.mxu0 0.0
    %41 = vmatprep.subr.mxu0 0.0
    %42 = vmatpush1.msra.mxu0 0.0
    %43 = vmatprep.subr.mxu0 0.0
    %44 = vmatpush1.msra.mxu0 0.0
    %45 = vmatprep.subr.mxu0 0.0
    %46 = vmatpush1.msra.mxu0 0.0
    %47 = vmatprep.subr.mxu0 0.0
    %48 = vmatpush1.msra.mxu0 0.0
    %49 = vmatprep.subr.mxu0 0.0
    %50 = vmatpush1.msra.mxu0 0.0
    %51 = vmatprep.subr.mxu0 0.0
    %52 = vmatpush1.msra.mxu0 0.0
    %53 = vmatprep.subr.mxu0 0.0
    %54 = vmatpush1.msra.mxu0 0.0
    %55 = vmatprep.subr.mxu0 0.0
    %56 = vmatpush1.msra.mxu0 0.0
    %57 = vmatprep.subr.mxu0 0.0
    %58 = vmatpush1.msra.mxu0 0.0
    %59 = vmatprep.subr.mxu0 0.0
    %60 = vmatpush1.msra.mxu0 %v20
    %61 = vmatprep.subr.mxu0 0.0
    %62 = vmatpush1.msra.mxu0 %v19
    %63 = vmatprep.subr.mxu0 0.0
    %64 = vmatpush1.msra.mxu0 %v18
    %65 = vmatprep.subr.mxu0 0.0
    %66 = vmatpush1.msra.mxu0 %v17
    %67 = vmatprep.subr.mxu0 0.0
    %68 = vmatpush2.msra.mxu0 0.0
    %69 = vmatprep.subr.mxu0 0.0
    %70 = vmatpush2.msra.mxu0 0.0
    %71 = vmatprep.subr.mxu0 0.0
    %72 = vmatpush2.msra.mxu0 0.0
    %73 = vmatprep.subr.mxu0 0.0
    %74 = vmatpush2.msra.mxu0 0.0
    %75 = vmatprep.subr.mxu0 0.0
    %76 = vmatpush2.msra.mxu0 0.0
    %77 = vmatprep.subr.mxu0 0.0
    %78 = vmatpush2.msra.mxu0 0.0
    %79 = vmatprep.subr.mxu0 0.0
    %80 = vmatpush2.msra.mxu0 0.0
    %81 = vmatprep.subr.mxu0 0.0
    %82 = vmatpush2.msra.mxu0 0.0
    %83 = vmatprep.subr.mxu0 0.0
    %84 = vmatpush2.msra.mxu0 0.0
    %85 = vmatprep.subr.mxu0 0.0
    %86 = vmatpush2.msra.mxu0 0.0
    %87 = vmatprep.subr.mxu0 0.0
    %88 = vmatpush2.msra.mxu0 0.0
    %89 = vmatprep.subr.mxu0 0.0
    %90 = vmatpush2.msra.mxu0 0.0
    %91 = vmatprep.subr.mxu0 0.0
    %92 = vmatpush2.msra.mxu0 0.0
    %93 = vmatprep.subr.mxu0 0.0
    %94 = vmatpush2.msra.mxu0 0.0
    %95 = vmatprep.subr.mxu0 0.0
    %96 = vmatpush2.msra.mxu0 0.0
    %97 = vmatprep.subr.mxu0 0.0
    %98 = vmatpush2.msra.mxu0 0.0
    %99 = vmatprep.mubr.f32.mxu0 0.0
    %100 = vmatmul.mubr.f32.gmra.mxu0 %v30
    %v101 = vpop.f32.mrf.mxu0
    %v102 = vadd.f32 %v26, %v101
    %v103 = vpop.f32.mrf.mxu0
    %104 = vmatprep.mubr.f32.mxu0 0.0
    %105 = vmatmul.mubr.f32.gmra.mxu0 %v33
    %v106 = vpop.f32.mrf.mxu0
    %v107 = vadd.f32 %v26, %v106
    %v108 = vpop.f32.mrf.mxu0
    %109 = vdwg.mxu0
    %v110 = vmax.f32 %v102, 0.0
    %v111 = vmax.f32 %v107, 0.0
    %vm112 = vcmask 130048
    %113 = vst.msk [vmem:[#allocation2] sm:$0xff] %vm112, %v110
    %114 = vst.msk [vmem:[#allocation2 + $0x8] sm:$0xff] %vm112, %v111
    // Predicated region
    $region14: #{tpu_custom_call.1} parent=1 // pred_check
      _
    $region15: #{tpu_custom_call.1} parent=1 // pred_check_branch
      %116 = sbr.rel (0) target = $region17
    $region16: #{tpu_custom_call.1} parent=1 // pred_region
      %s118 = ssub.s32 256, 256
      %119 = vsyncadd [#allocation3], %s118
      %s120 = sshll.u32 [#allocation2], 4
      %s121 = int_to_ptr.vmem [resolvable:$true] %s120
      %126 = dma.vmem_to_hbm [thread:$0]  %s121, 256, %s3, [#allocation3], 128, 128, 8
    $region17: #{tpu_custom_call.1} parent=1 // pred_fallthru
      _
    // Predicated region
    $region18: #{tpu_custom_call.1} parent=1 // pred_check
      _
    $region19: #{tpu_custom_call.1} parent=1 // pred_check_branch
      %128 = sbr.rel (0) target = $region21
    $region20: #{tpu_custom_call.1} parent=1 // pred_region
      %129 = dma.done [#allocation3], 256
    $region21: #{tpu_custom_call.1} parent=1 // pred_fallthru
      _
    %130 = vsyncpa [#allocation3], 1

</llo_original>
